<compile_context>
chip_gen: v6e
topology: v6e:2x2x1
jax: 0.10.0
libtpu: 0.0.40
codegen_flags: <defaults>
</compile_context>

<pallas_src>
import jax
import jax.numpy as jnp
from jax.experimental import pallas as pl
from jax.experimental.pallas import tpu as pltpu

IN_FEATURES = 10
HIDDEN = 5
OUT_FEATURES = 2
HID_PAD = 128  # lane-dense padding for MXU operands (weights only, never activations' HBM I/O)


def _round_up(x: int, m: int) -> int:
    return ((x + m - 1) // m) * m


def mlp_kernel(x_ref, w1_ref, b1_ref, w2_ref, b2_ref, o_ref):
    # x:  (TB, 10)   f32   streamed activations
    # w1: (10, 128)  bf16  (cols >= 5 are zero)
    # b1: (1, 128)   f32   (cols >= 5 are zero)
    # w2: (128, 128) bf16  (only [0:5, 0:2] nonzero)
    # b2: (1, 2)     f32
    # o:  (TB, 2)    f32
    xb = x_ref[...].astype(jnp.bfloat16)  # in-kernel cast: VPU slot, no extra HBM pass
    # Layer 1 on the MXU, f32 accumulation; bias + ReLU epilogue in f32.
    h = jnp.dot(xb, w1_ref[...], preferred_element_type=jnp.float32)
    h = jnp.maximum(h + b1_ref[...], 0.0)
    # Layer 2: bf16 activations into the MXU, f32 accumulation.  Padded hidden columns
    # of h are exactly zero, and padded rows of w2 are zero, so no slicing is needed
    # before the dot.
    o = jnp.dot(h.astype(jnp.bfloat16), w2_ref[...], preferred_element_type=jnp.float32)
    # Slice to the 2 real output lanes before the epilogue so bias-add + store only
    # touch 2 lanes (8 B/row of HBM writeback).
    o_ref[...] = (o[:, :OUT_FEATURES] + b2_ref[...]).astype(o_ref.dtype)


def simple_net_forward(x, w1, b1, w2, b2, *, tb=8192):
    """x: (B, 10) f32; w1: (10, 5); b1: (5,); w2: (5, 2); b2: (2,). Returns (B, 2) f32."""
    B = x.shape[0]

    # Zero-pad weights/biases to lane-dense MXU operands.  These are tiny (<40 KiB),
    # DMA'd into VMEM exactly once (constant index_maps below).
    w1p = jnp.zeros((IN_FEATURES, HID_PAD), jnp.bfloat16).at[:, :HIDDEN].set(
        w1.astype(jnp.bfloat16))
    b1p = jnp.zeros((1, HID_PAD), jnp.float32).at[0, :HIDDEN].set(b1.astype(jnp.float32))
    w2p = jnp.zeros((HID_PAD, HID_PAD), jnp.bfloat16).at[:HIDDEN, :OUT_FEATURES].set(
        w2.astype(jnp.bfloat16))
    b2r = b2.reshape(1, OUT_FEATURES).astype(jnp.float32)

    # Batch tile: multiple of 8 (f32 sublane), capped at ceil(B/2) so the "parallel"
    # batch axis has at least 2 steps for the two v7x TensorCores.  No jnp.pad of x:
    # the ragged last tile is masked by Pallas (OOB reads are harmless garbage rows,
    # OOB stores are dropped).
    TB = max(8, min(tb, _round_up(pl.cdiv(B, 2), 8)))
    grid = (pl.cdiv(B, TB),)

    return pl.pallas_call(
        mlp_kernel,
        out_shape=jax.ShapeDtypeStruct((B, OUT_FEATURES), jnp.float32),
        grid_spec=pltpu.PrefetchScalarGridSpec(
            num_scalar_prefetch=0,
            grid=grid,
            in_specs=[
                # Streamed activations: new tile every grid step (double-buffered DMA).
                pl.BlockSpec((TB, IN_FEATURES), lambda i: (i, 0)),
                # Weights / biases: constant block index -> VMEM-resident.
                pl.BlockSpec((IN_FEATURES, HID_PAD), lambda i: (0, 0)),
                pl.BlockSpec((1, HID_PAD), lambda i: (0, 0)),
                pl.BlockSpec((HID_PAD, HID_PAD), lambda i: (0, 0)),
                pl.BlockSpec((1, OUT_FEATURES), lambda i: (0, 0)),
            ],
            out_specs=pl.BlockSpec((TB, OUT_FEATURES), lambda i: (i, 0)),
        ),
        compiler_params=pltpu.CompilerParams(
            dimension_semantics=("parallel",),   # shard batch tiles across TCs
            vmem_limit_bytes=48 * 1024 * 1024,   # TB=8192 f32 tiles + body temps, v7x-safe
        ),
    )(x, w1p, b1p, w2p, b2r)


def reference_forward(x, w1, b1, w2, b2):
    """Pure-JAX reference mirroring the kernel's bf16 quantization + f32 accumulation."""
    hp = jax.lax.Precision.HIGHEST
    f32 = jnp.float32
    xq = x.astype(jnp.bfloat16).astype(f32)
    w1q = w1.astype(jnp.bfloat16).astype(f32)
    w2q = w2.astype(jnp.bfloat16).astype(f32)
    h = jnp.maximum(jnp.dot(xq, w1q, precision=hp) + b1, 0.0)
    hq = h.astype(jnp.bfloat16).astype(f32)
    return jnp.dot(hq, w2q, precision=hp) + b2


def init_params(key):
    """Deterministic parameter init (PyTorch-style uniform ranges, fixed seed)."""
    k1, k2, k3, k4 = jax.random.split(key, 4)
    bound1 = 1.0 / jnp.sqrt(IN_FEATURES)
    bound2 = 1.0 / jnp.sqrt(HIDDEN)
    # Stored already transposed: [in_features, out_features] (== PyTorch W.T).
    w1 = jax.random.uniform(k1, (IN_FEATURES, HIDDEN), jnp.float32, -bound1, bound1)
    b1 = jax.random.uniform(k2, (HIDDEN,), jnp.float32, -bound1, bound1)
    w2 = jax.random.uniform(k3, (HIDDEN, OUT_FEATURES), jnp.float32, -bound2, bound2)
    b2 = jax.random.uniform(k4, (OUT_FEATURES,), jnp.float32, -bound2, bound2)
    return w1, b1, w2, b2


if __name__ == "__main__":
    key = jax.random.PRNGKey(0)
    kx, kp = jax.random.split(key)
    w1, b1, w2, b2 = init_params(kp)

    # Small shape; batch=10 with an 8-row tile exercises the multi-tile grid AND the
    # masked ragged last tile (no jnp.pad path anymore).
    batch = 10
    x = jax.random.normal(kx, (batch, IN_FEATURES), jnp.float32)
    out = jax.block_until_ready(simple_net_forward(x, w1, b1, w2, b2))
    ref = reference_forward(x, w1, b1, w2, b2)
    assert out.shape == (batch, OUT_FEATURES)
    assert jnp.allclose(out, ref, atol=1e-4, rtol=1e-4)

    print("KERNEL_OK")
</pallas_src>

<mosaic_0001>
module attributes {stable_mosaic.version = 11 : i64} {
  func.func @mlp_kernel(%arg0: i32, %arg1: memref<8x10xf32, #tpu.memory_space<vmem>>, %arg2: memref<10x128xbf16, #tpu.memory_space<vmem>>, %arg3: memref<1x128xf32, #tpu.memory_space<vmem>>, %arg4: memref<128x128xbf16, #tpu.memory_space<vmem>>, %arg5: memref<1x2xf32, #tpu.memory_space<vmem>>, %arg6: memref<8x2xf32, #tpu.memory_space<vmem>>) attributes {dimension_semantics = [#tpu.dimension_semantics<parallel>], iteration_bounds = array<i64: 2>, scalar_prefetch = 0 : i64, scratch_operands = 0 : i64, tpu.core_type = #tpu.core_type<tc>, window_params = [{transform_indices = @transform_0, window_bounds = array<i64: 8, 10>}, {pipeline_mode = #tpu.pipeline_mode<synchronous>, transform_indices = @transform_1, window_bounds = array<i64: 10, 128>}, {pipeline_mode = #tpu.pipeline_mode<synchronous>, transform_indices = @transform_2, window_bounds = array<i64: 1, 128>}, {pipeline_mode = #tpu.pipeline_mode<synchronous>, transform_indices = @transform_3, window_bounds = array<i64: 128, 128>}, {pipeline_mode = #tpu.pipeline_mode<synchronous>, transform_indices = @transform_4, window_bounds = array<i64: 1, 2>}, {transform_indices = @transform_5, window_bounds = array<i64: 8, 2>}]} {
    %c0 = arith.constant 0 : index
    %c0_0 = arith.constant 0 : index
    %0 = vector.load %arg1[%c0, %c0_0] : memref<8x10xf32, #tpu.memory_space<vmem>>, vector<8x10xf32>
    %1 = arith.truncf %0 : vector<8x10xf32> to vector<8x10xbf16>
    %c0_1 = arith.constant 0 : index
    %c0_2 = arith.constant 0 : index
    %2 = vector.load %arg2[%c0_1, %c0_2] : memref<10x128xbf16, #tpu.memory_space<vmem>>, vector<10x128xbf16>
    %cst = arith.constant dense<0.000000e+00> : vector<8x128xf32>
    %3 = tpu.matmul %1, %2, %cst {dimension_numbers = #tpu.dot_dimension_numbers<[1], [0], [0], [1], [0, 0, 1, 1], [], []>} : vector<8x10xbf16>, vector<10x128xbf16>, vector<8x128xf32> -> vector<8x128xf32>
    %c0_3 = arith.constant 0 : index
    %c0_4 = arith.constant 0 : index
    %4 = vector.load %arg3[%c0_3, %c0_4] : memref<1x128xf32, #tpu.memory_space<vmem>>, vector<1x128xf32>
    %5 = vector.broadcast %4 : vector<1x128xf32> to vector<8x128xf32>
    %6 = arith.addf %3, %5 : vector<8x128xf32>
    %cst_5 = arith.constant 0.000000e+00 : f32
    %7 = vector.broadcast %cst_5 : f32 to vector<8x128xf32>
    %8 = arith.maximumf %6, %7 : vector<8x128xf32>
    %9 = arith.truncf %8 : vector<8x128xf32> to vector<8x128xbf16>
    %c0_6 = arith.constant 0 : index
    %c0_7 = arith.constant 0 : index
    %10 = vector.load %arg4[%c0_6, %c0_7] : memref<128x128xbf16, #tpu.memory_space<vmem>>, vector<128x128xbf16>
    %cst_8 = arith.constant dense<0.000000e+00> : vector<8x128xf32>
    %11 = tpu.matmul %9, %10, %cst_8 {dimension_numbers = #tpu.dot_dimension_numbers<[1], [0], [0], [1], [0, 0, 1, 1], [], []>} : vector<8x128xbf16>, vector<128x128xbf16>, vector<8x128xf32> -> vector<8x128xf32>
    %12 = vector.extract_strided_slice %11 {offsets = [0, 0], sizes = [8, 2], strides = [1, 1]} : vector<8x128xf32> to vector<8x2xf32>
    %c0_9 = arith.constant 0 : index
    %c0_10 = arith.constant 0 : index
    %13 = vector.load %arg5[%c0_9, %c0_10] : memref<1x2xf32, #tpu.memory_space<vmem>>, vector<1x2xf32>
    %14 = vector.broadcast %13 : vector<1x2xf32> to vector<8x2xf32>
    %15 = arith.addf %12, %14 : vector<8x2xf32>
    %c0_11 = arith.constant 0 : index
    %c0_12 = arith.constant 0 : index
    %16 = vector.load %arg6[%c0_11, %c0_12] : memref<8x2xf32, #tpu.memory_space<vmem>>, vector<8x2xf32>
    tpu.vector_store %arg6[%c0_11, %c0_12], %15 {strides = array<i32>} : memref<8x2xf32, #tpu.memory_space<vmem>>, vector<8x2xf32>,
    return
  }
  func.func @transform_0(%arg0: i32) -> (i32, i32) {
    %c0_i32 = arith.constant 0 : i32
    %c0_i32_0 = arith.constant 0 : i32
    return %arg0, %c0_i32 : i32, i32
  }
  func.func @transform_1(%arg0: i32) -> (i32, i32) {
    %c0_i32 = arith.constant 0 : i32
    %c0_i32_0 = arith.constant 0 : i32
    %c0_i32_1 = arith.constant 0 : i32
    return %c0_i32, %c0_i32_0 : i32, i32
  }
  func.func @transform_2(%arg0: i32) -> (i32, i32) {
    %c0_i32 = arith.constant 0 : i32
    %c0_i32_0 = arith.constant 0 : i32
    %c0_i32_1 = arith.constant 0 : i32
    return %c0_i32, %c0_i32_0 : i32, i32
  }
  func.func @transform_3(%arg0: i32) -> (i32, i32) {
    %c0_i32 = arith.constant 0 : i32
    %c0_i32_0 = arith.constant 0 : i32
    %c0_i32_1 = arith.constant 0 : i32
    return %c0_i32, %c0_i32_0 : i32, i32
  }
  func.func @transform_4(%arg0: i32) -> (i32, i32) {
    %c0_i32 = arith.constant 0 : i32
    %c0_i32_0 = arith.constant 0 : i32
    %c0_i32_1 = arith.constant 0 : i32
    return %c0_i32, %c0_i32_0 : i32, i32
  }
  func.func @transform_5(%arg0: i32) -> (i32, i32) {
    %c0_i32 = arith.constant 0 : i32
    %c0_i32_0 = arith.constant 0 : i32
    return %arg0, %c0_i32 : i32, i32
  }
}

</mosaic_0001>

<llo_original>
// kernel: tpu_custom_call.1
$region0: #{tpu_custom_call.1}
  #allocation0 [shape = 'u32[]', space=smem, size = 0x4, offset = 0x4, fixed_abs, tag = 'smem constant byte address 0x4 - core index']
  #allocation1 [shape = 'u32[144,128]{1,0:T(1,128)}', space=vmem, size = 0x12000, scoped, tag = 'internal scratch']
  %s0 = inlined_call_operand.hbm [shape: f32[10,10], index: 0, kind: input, shape index: {}]
  %s1 = inlined_call_operand.hbm [shape: bf16[10,128], index: 1, kind: input, shape index: {}]
  %s2 = inlined_call_operand.vmem [shape: f32[1,128], index: 2, kind: input, shape index: {}]
  %s3 = inlined_call_operand.hbm [shape: bf16[128,128], index: 3, kind: input, shape index: {}]
  %s4 = inlined_call_operand.vmem [shape: f32[1,2], index: 4, kind: input, shape index: {}]
  %s5 = inlined_call_operand.vmem [shape: f32[10,2], index: 5, kind: output, shape index: {}]
  %s6 = sld [smem:[#allocation0]]
  $region65: #{tpu_custom_call.1} parent=0
    _
  %s8 = ssub.s32 1, %s6
  %s9 = scalar_select 0, %s8, %s6
  $region1: #{tpu_custom_call.1} parent=0
    #allocation2 [shape = 'u8[8192]{0}', space=vmem, size = 0x2000, scoped, tag = 'input window, operand 0']
    #allocation3 [shape = 's32[2]{0}', space=sflag, size = 0x8, scoped, tag = 'scoped memory for tpu_custom_call.1']
    #allocation4 [shape = 'u8[4096]{0}', space=vmem, size = 0x1000, scoped, tag = 'input window, operand 1, single buffered']
    #allocation5 [shape = 's32[1]{0}', space=sflag, size = 0x4, scoped, tag = 'scoped memory for tpu_custom_call.1']
    #allocation6 [shape = 'u8[32768]{0}', space=vmem, size = 0x8000, scoped, tag = 'input window, operand 3, single buffered']
    %10 = vsyncpa [#allocation3], 0
    %s11 = scalar_lea.sflag [#allocation3], 1
    %12 = vsyncpa %s11, 0
    %13 = vsyncpa [#allocation5], 0
    loop: start=0, step=1, limit=4
    $region2: #{tpu_custom_call.1} parent=1 // loop_pre_header
      _
    $region3: #{tpu_custom_call.1} parent=1 // loop_header
      %s15 = sphi 0, %s19
      %p16 = scmp.ge.s32.totalorder %s15, 4
      %s25 = sphi 0, %s27
      %s28 = sphi 0, %s25
      %s29 = sphi 0, %s28
      %s45 = sphi 0, %s29
      %s49 = sphi 0, %s49
      %s51 = sphi 0, %s49
      %s52 = sphi 0, %s51
      %s66 = sphi 0, %s52
      %s70 = sphi 0, %s70
      %s72 = sphi 0, %s70
      %s73 = sphi 0, %s72
      %s87 = sphi 0, %s73
      %s91 = sphi 0, %s91
      %s93 = sphi 0, %s91
      %s94 = sphi 0, %s93
      %s108 = sphi 0, %s94
      %s112 = sphi 0, %s112
      %s114 = sphi 0, %s112
      %s115 = sphi 0, %s114
      %s129 = sphi 0, %s115
      %s135 = sphi 0, %s137
      %s138 = sphi 0, %s135
      %s139 = sphi 0, %s138
      %s155 = sphi 0, %s139
    $region4: #{tpu_custom_call.1} parent=1 // loop_header_branch
      %18 = sbr.rel (%p16) target = $region8
    $region5: #{tpu_custom_call.1} parent=1 // loop_body
      %s20 = ssub.s32 %s15, 1
      %s21 = ssub.s32 %s15, 2
      %s22 = sadd.s32 %s15, 1
      %s23 = ssub.s32 %s15, %s22
      %p24 = scmp.eq.s32.totalorder %s23, 0
      %s26 = sadd.s32 %s25, 1
      %s27 = scalar_select %p24, %s25, %s26
      %p30 = pneg %p24
      %p31 = scmp.eq.s32.totalorder %s15, 1
      %p32 = por %p30, %p31
      %p33 = scmp.ne.s32.totalorder %s25, %s28
      %p34 = scmp.eq.s32.totalorder %s15, 0
      %p35 = por %p33, %p34
      %p36 = scmp.ne.s32.totalorder %s25, %s28
      %p37 = scmp.eq.s32.totalorder %s20, 1
      %p38 = por %p36, %p37
      %p39 = scmp.ne.s32.totalorder %s28, %s29
      %p40 = scmp.eq.s32.totalorder %s20, 0
      %p41 = por %p39, %p40
      %p42 = scmp.ne.s32.totalorder %s28, %s29
      %p43 = scmp.eq.s32.totalorder %s21, 1
      %p44 = por %p42, %p43
      %p46 = scmp.ne.s32.totalorder %s29, %s45
      %p47 = scmp.eq.s32.totalorder %s21, 0
      %p48 = por %p46, %p47
      %s50 = sadd.s32 %s49, 1
      %p53 = scmp.eq.s32.totalorder %s15, 1
      %p54 = scmp.ne.s32.totalorder %s49, %s51
      %p55 = scmp.eq.s32.totalorder %s15, 0
      %p56 = por %p54, %p55
      %p57 = scmp.ne.s32.totalorder %s49, %s51
      %p58 = scmp.eq.s32.totalorder %s20, 1
      %p59 = por %p57, %p58
      %p60 = scmp.ne.s32.totalorder %s51, %s52
      %p61 = scmp.eq.s32.totalorder %s20, 0
      %p62 = por %p60, %p61
      %p63 = scmp.ne.s32.totalorder %s51, %s52
      %p64 = scmp.eq.s32.totalorder %s21, 1
      %p65 = por %p63, %p64
      %p67 = scmp.ne.s32.totalorder %s52, %s66
      %p68 = scmp.eq.s32.totalorder %s21, 0
      %p69 = por %p67, %p68
      %s71 = sadd.s32 %s70, 1
      %p74 = scmp.eq.s32.totalorder %s15, 1
      %p75 = scmp.ne.s32.totalorder %s70, %s72
      %p76 = scmp.eq.s32.totalorder %s15, 0
      %p77 = por %p75, %p76
      %p78 = scmp.ne.s32.totalorder %s70, %s72
      %p79 = scmp.eq.s32.totalorder %s20, 1
      %p80 = por %p78, %p79
      %p81 = scmp.ne.s32.totalorder %s72, %s73
      %p82 = scmp.eq.s32.totalorder %s20, 0
      %p83 = por %p81, %p82
      %p84 = scmp.ne.s32.totalorder %s72, %s73
      %p85 = scmp.eq.s32.totalorder %s21, 1
      %p86 = por %p84, %p85
      %p88 = scmp.ne.s32.totalorder %s73, %s87
      %p89 = scmp.eq.s32.totalorder %s21, 0
      %p90 = por %p88, %p89
      %s92 = sadd.s32 %s91, 1
      %p95 = scmp.eq.s32.totalorder %s15, 1
      %p96 = scmp.ne.s32.totalorder %s91, %s93
      %p97 = scmp.eq.s32.totalorder %s15, 0
      %p98 = por %p96, %p97
      %p99 = scmp.ne.s32.totalorder %s91, %s93
      %p100 = scmp.eq.s32.totalorder %s20, 1
      %p101 = por %p99, %p100
      %p102 = scmp.ne.s32.totalorder %s93, %s94
      %p103 = scmp.eq.s32.totalorder %s20, 0
      %p104 = por %p102, %p103
      %p105 = scmp.ne.s32.totalorder %s93, %s94
      %p106 = scmp.eq.s32.totalorder %s21, 1
      %p107 = por %p105, %p106
      %p109 = scmp.ne.s32.totalorder %s94, %s108
      %p110 = scmp.eq.s32.totalorder %s21, 0
      %p111 = por %p109, %p110
      %s113 = sadd.s32 %s112, 1
      %p116 = scmp.eq.s32.totalorder %s15, 1
      %p117 = scmp.ne.s32.totalorder %s112, %s114
      %p118 = scmp.eq.s32.totalorder %s15, 0
      %p119 = por %p117, %p118
      %p120 = scmp.ne.s32.totalorder %s112, %s114
      %p121 = scmp.eq.s32.totalorder %s20, 1
      %p122 = por %p120, %p121
      %p123 = scmp.ne.s32.totalorder %s114, %s115
      %p124 = scmp.eq.s32.totalorder %s20, 0
      %p125 = por %p123, %p124
      %p126 = scmp.ne.s32.totalorder %s114, %s115
      %p127 = scmp.eq.s32.totalorder %s21, 1
      %p128 = por %p126, %p127
      %p130 = scmp.ne.s32.totalorder %s115, %s129
      %p131 = scmp.eq.s32.totalorder %s21, 0
      %p132 = por %p130, %p131
      %s133 = ssub.s32 %s15, %s22
      %p134 = scmp.eq.s32.totalorder %s133, 0
      %s136 = sadd.s32 %s135, 1
      %s137 = scalar_select %p134, %s135, %s136
      %p140 = pneg %p134
      %p141 = scmp.eq.s32.totalorder %s15, 1
      %p142 = por %p140, %p141
      %p143 = scmp.ne.s32.totalorder %s135, %s138
      %p144 = scmp.eq.s32.totalorder %s15, 0
      %p145 = por %p143, %p144
      %p146 = scmp.ne.s32.totalorder %s135, %s138
      %p147 = scmp.eq.s32.totalorder %s20, 1
      %p148 = por %p146, %p147
      %p149 = scmp.ne.s32.totalorder %s138, %s139
      %p150 = scmp.eq.s32.totalorder %s20, 0
      %p151 = por %p149, %p150
      %p152 = scmp.ne.s32.totalorder %s138, %s139
      %p153 = scmp.eq.s32.totalorder %s21, 1
      %p154 = por %p152, %p153
      %p156 = scmp.ne.s32.totalorder %s139, %s155
      %p157 = scmp.eq.s32.totalorder %s21, 0
      %p158 = por %p156, %p157
      %p159 = scmp.le.s32.totalorder 1, %s15
      %p160 = scmp.lt.s32.totalorder %s15, 3
      %p161 = pnand %p159, %p160
      %p162 = pneg %p161
      // Predicated region
      $region9: #{tpu_custom_call.1} parent=5 // pred_check
        _
      $region10: #{tpu_custom_call.1} parent=5 // pred_check_branch
        %164 = sbr.rel (%p161) target = $region12
      $region11: #{tpu_custom_call.1} parent=5 // pred_region
        %s165 = ssub.s32 %s15, 1
        // Predicated region
        $region13: #{tpu_custom_call.1} parent=11 // pred_check
          %p166 = pneg %p62
        $region14: #{tpu_custom_call.1} parent=11 // pred_check_branch
          %168 = sbr.rel (%p166) target = $region16
        $region15: #{tpu_custom_call.1} parent=11 // pred_region
          %s170 = ssub.s32 128, 128
          %171 = vsyncadd [#allocation5], %s170
          %s172 = sshll.u32 [#allocation4], 4
          %s173 = int_to_ptr.vmem [resolvable:$true] %s172
          %178 = dma.hbm_to_vmem [thread:$0]  %s1, 128, %s173, [#allocation5], 64, 64, 4
        $region16: #{tpu_custom_call.1} parent=11 // pred_fallthru
          _
        // Predicated region
        $region17: #{tpu_custom_call.1} parent=11 // pred_check
          %p179 = pneg %p83
        $region18: #{tpu_custom_call.1} parent=11 // pred_check_branch
          %181 = sbr.rel (%p179) target = $region20
        $region19: #{tpu_custom_call.1} parent=11 // pred_region
          _
        $region20: #{tpu_custom_call.1} parent=11 // pred_fallthru
          _
        // Predicated region
        $region21: #{tpu_custom_call.1} parent=11 // pred_check
          %p182 = pneg %p104
        $region22: #{tpu_custom_call.1} parent=11 // pred_check_branch
          %184 = sbr.rel (%p182) target = $region24
        $region23: #{tpu_custom_call.1} parent=11 // pred_region
          %s186 = ssub.s32 1024, 1024
          %187 = vsyncadd [#allocation5], %s186
          %s188 = sshll.u32 [#allocation6], 4
          %s189 = int_to_ptr.vmem [resolvable:$true] %s188
          %194 = dma.hbm_to_vmem [thread:$0]  %s3, 1024, %s189, [#allocation5], 64, 64, 4
        $region24: #{tpu_custom_call.1} parent=11 // pred_fallthru
          _
        // Predicated region
        $region25: #{tpu_custom_call.1} parent=11 // pred_check
          %p195 = pneg %p125
        $region26: #{tpu_custom_call.1} parent=11 // pred_check_branch
          %197 = sbr.rel (%p195) target = $region28
        $region27: #{tpu_custom_call.1} parent=11 // pred_region
          _
        $region28: #{tpu_custom_call.1} parent=11 // pred_fallthru
          _
      $region12: #{tpu_custom_call.1} parent=5 // pred_fallthru
        _
      %p198 = scmp.lt.s32.totalorder %s15, 2
      // Predicated region
      $region29: #{tpu_custom_call.1} parent=5 // pred_check
        %p199 = pneg %p198
      $region30: #{tpu_custom_call.1} parent=5 // pred_check_branch
        %201 = sbr.rel (%p199) target = $region32
      $region31: #{tpu_custom_call.1} parent=5 // pred_region
        // Predicated region
        $region33: #{tpu_custom_call.1} parent=31 // pred_check
          %p202 = pneg %p35
        $region34: #{tpu_custom_call.1} parent=31 // pred_check_branch
          %204 = sbr.rel (%p202) target = $region36
        $region35: #{tpu_custom_call.1} parent=31 // pred_region
          %s205 = sand.u32 %s25, 1
          %s206 = scalar_lea.sflag [#allocation3], %s205
          %s207 = sand.u32 %s25, 1
          %s208 = smul.addr %s207, 8
          %s209 = scalar_lea.vmem [#allocation2], %s208
          %s211 = ssub.s32 128, 128
          %212 = vsyncadd %s206, %s211
          %s213 = smul.addr %s15, 128
          %s214 = scalar_lea.hbm %s0, %s213
          %s216 = sshll.u32 %s209, 4
          %s217 = int_to_ptr.vmem [resolvable:$true] %s216
          %219 = dma.hbm_to_vmem [thread:$0]  %s214, 128, %s217, %s206
        $region36: #{tpu_custom_call.1} parent=31 // pred_fallthru
          _
      $region32: #{tpu_custom_call.1} parent=5 // pred_fallthru
        _
      %p220 = scmp.le.s32.totalorder 1, %s15
      %p221 = scmp.lt.s32.totalorder %s15, 3
      %p222 = pnand %p220, %p221
      %p223 = pneg %p222
      // Predicated region
      $region37: #{tpu_custom_call.1} parent=5 // pred_check
        _
      $region38: #{tpu_custom_call.1} parent=5 // pred_check_branch
        %225 = sbr.rel (%p222) target = $region40
      $region39: #{tpu_custom_call.1} parent=5 // pred_region
        %s226 = ssub.s32 %s15, 1
        %s227 = sand.u32 %s28, 1
        %s228 = scalar_lea.sflag [#allocation3], %s227
        %s229 = sand.u32 %s28, 1
        %s230 = smul.addr %s229, 8
        %s231 = scalar_lea.vmem [#allocation2], %s230
        // Predicated region
        $region41: #{tpu_custom_call.1} parent=39 // pred_check
          %p232 = pneg %p41
        $region42: #{tpu_custom_call.1} parent=39 // pred_check_branch
          %234 = sbr.rel (%p232) target = $region44
        $region43: #{tpu_custom_call.1} parent=39 // pred_region
          %235 = dma.done %s228, 128
        $region44: #{tpu_custom_call.1} parent=39 // pred_fallthru
          _
        // Predicated region
        $region45: #{tpu_custom_call.1} parent=39 // pred_check
          %p236 = pneg %p62
        $region46: #{tpu_custom_call.1} parent=39 // pred_check_branch
          %238 = sbr.rel (%p236) target = $region48
        $region47: #{tpu_custom_call.1} parent=39 // pred_region
          %239 = dma.done [#allocation5], 128
        $region48: #{tpu_custom_call.1} parent=39 // pred_fallthru
          _
        // Predicated region
        $region49: #{tpu_custom_call.1} parent=39 // pred_check
          %p240 = pneg %p104
        $region50: #{tpu_custom_call.1} parent=39 // pred_check_branch
          %242 = sbr.rel (%p240) target = $region52
        $region51: #{tpu_custom_call.1} parent=39 // pred_region
          %243 = dma.done [#allocation5], 1024
        $region52: #{tpu_custom_call.1} parent=39 // pred_fallthru
          _
        %s244 = sand.u32 %s28, 1
        %s245 = scalar_lea.sflag [#allocation3], %s244
        %s246 = sand.u32 %s28, 1
        %s247 = smul.addr %s246, 8
        %s248 = scalar_lea.vmem [#allocation2], %s247
        %p249 = pneg %p41
        %p250 = pneg %p38
        %p251 = pneg %p62
        %p252 = pneg %p59
        %p253 = pneg %p83
        %p254 = pneg %p80
        %p255 = pneg %p104
        %p256 = pneg %p101
        %p257 = pneg %p125
        %p258 = pneg %p122
        %p259 = pneg %p151
        %p260 = pneg %p148
        %p261 = scmp.lt.s32.totalorder %s20, 1
        %s262 = scalar_select %p261, %s20, 1
        %s263 = smul.addr %s262, 8
        %s264 = scalar_lea.vmem %s5, %s263
        %p265 = scmp.lt.s32.totalorder %s20, 1
        %s266 = scalar_select %p265, %s20, 1
        %s267 = smul.addr %s266, 8
        %s268 = scalar_lea.vmem %s5, %s267
        %v270 = vld [vmem:[%s231] sm:$0xff]
        %v271 = vpack.c.bf16 %v270, %v270
        %v272 = vld [vmem:[#allocation4] sm:$0xf]
        %v273 = vld [vmem:[#allocation4 + $0x4] sm:$0x1]
        %v274 = vld [vmem:[%s2] sm:$0x1]
        %v276 = vlaneseq
        %v277 = vshrl.u32 %v276, 7
        %v278 = vsub.s32 0, %v277
        %v279 = vrot.slane %v274, %v278
        %v283 = vunpack.c.l.b16 %v272
        %v284 = vunpack.c.l.b16 %v273
        %v285 = vpack.c.b16 %v284, %v283
        %vm286 = vcmask 80896
        %v288 = vsel %vm286, %v271, 0
        %vm290 = vcmask 1044480
        %v292 = vsel %vm290, %v285, 0
        %294 = vmatprep.subr.bf16.mxu0 0
        %295 = vmatpush1.bf16.msra.mxu0 0
        %296 = vmatprep.subr.bf16.mxu0 0
        %297 = vmatpush1.bf16.msra.mxu0 0
        %298 = vmatprep.subr.bf16.mxu0 0
        %299 = vmatpush1.bf16.msra.mxu0 0
        %300 = vmatprep.subr.bf16.mxu0 0
        %301 = vmatpush1.bf16.msra.mxu0 0
        %302 = vmatprep.subr.bf16.mxu0 0
        %303 = vmatpush1.bf16.msra.mxu0 0
        %304 = vmatprep.subr.bf16.mxu0 0
        %305 = vmatpush1.bf16.msra.mxu0 0
        %306 = vmatprep.subr.bf16.mxu0 0
        %307 = vmatpush1.bf16.msra.mxu0 0
        %308 = vmatprep.subr.bf16.mxu0 0
        %309 = vmatpush1.bf16.msra.mxu0 %v292
        %310 = vmatprep.subr.bf16.mxu0 0
        %311 = vmatpush2.bf16.msra.mxu0 0
        %312 = vmatprep.subr.bf16.mxu0 0
        %313 = vmatpush2.bf16.msra.mxu0 0
        %314 = vmatprep.subr.bf16.mxu0 0
        %315 = vmatpush2.bf16.msra.mxu0 0
        %316 = vmatprep.subr.bf16.mxu0 0
        %317 = vmatpush2.bf16.msra.mxu0 0
        %318 = vmatprep.subr.bf16.mxu0 0
        %319 = vmatpush2.bf16.msra.mxu0 0
        %320 = vmatprep.subr.bf16.mxu0 0
        %321 = vmatpush2.bf16.msra.mxu0 0
        %322 = vmatprep.subr.bf16.mxu0 0
        %323 = vmatpush2.bf16.msra.mxu0 0
        %324 = vmatprep.subr.bf16.mxu0 0
        %325 = vmatpush2.bf16.msra.mxu0 0
        %326 = vmatprep.mubr.bf16.mxu0 0
        %327 = vmatmul.mubr.bf16.gmra.mxu0 %v288
        %v328 = vpop.f32.mrf.mxu0
        %v329 = vadd.f32 %v279, %v328
        %v330 = vpop.f32.mrf.mxu0
        %v331 = vpop.f32.mrf.mxu0
        %v332 = vpop.f32.mrf.mxu0
        %333 = vdwg.mxu0
        %v334 = vmax.f32 %v329, 0.0
        %v335 = vpack.c.bf16 %v334, %v334
        %v336 = vld [vmem:[#allocation6] sm:$0xf]
        %v337 = vld [vmem:[#allocation6 + $0x4] sm:$0xf]
        %v338 = vld [vmem:[#allocation6 + $0x8] sm:$0xf]
        %v339 = vld [vmem:[#allocation6 + $0xc] sm:$0xf]
        %v340 = vld [vmem:[#allocation6 + $0x10] sm:$0xf]
        %v341 = vld [vmem:[#allocation6 + $0x14] sm:$0xf]
        %v342 = vld [vmem:[#allocation6 + $0x18] sm:$0xf]
        %v343 = vld [vmem:[#allocation6 + $0x1c] sm:$0xf]
        %v344 = vld [vmem:[#allocation6 + $0x20] sm:$0xf]
        %v345 = vld [vmem:[#allocation6 + $0x24] sm:$0xf]
        %v346 = vld [vmem:[#allocation6 + $0x28] sm:$0xf]
        %v347 = vld [vmem:[#allocation6 + $0x2c] sm:$0xf]
        %v348 = vld [vmem:[#allocation6 + $0x30] sm:$0xf]
        %v349 = vld [vmem:[#allocation6 + $0x34] sm:$0xf]
        %v350 = vld [vmem:[#allocation6 + $0x38] sm:$0xf]
        %v351 = vld [vmem:[#allocation6 + $0x3c] sm:$0xf]
        %v368 = vunpack.c.l.b16 %v336
        %v369 = vunpack.c.l.b16 %v337
        %v370 = vunpack.c.l.b16 %v338
        %v371 = vunpack.c.l.b16 %v339
        %v372 = vunpack.c.l.b16 %v340
        %v373 = vunpack.c.l.b16 %v341
        %v374 = vunpack.c.l.b16 %v342
        %v375 = vunpack.c.l.b16 %v343
        %v376 = vunpack.c.l.b16 %v344
        %v377 = vunpack.c.l.b16 %v345
        %v378 = vunpack.c.l.b16 %v346
        %v379 = vunpack.c.l.b16 %v347
        %v380 = vunpack.c.l.b16 %v348
        %v381 = vunpack.c.l.b16 %v349
        %v382 = vunpack.c.l.b16 %v350
        %v383 = vunpack.c.l.b16 %v351
        %v384 = vpack.c.b16 %v369, %v368
        %v385 = vpack.c.b16 %v371, %v370
        %v386 = vpack.c.b16 %v373, %v372
        %v387 = vpack.c.b16 %v375, %v374
        %v388 = vpack.c.b16 %v377, %v376
        %v389 = vpack.c.b16 %v379, %v378
        %v390 = vpack.c.b16 %v381, %v380
        %v391 = vpack.c.b16 %v383, %v382
        %400 = vmatprep.subr.bf16.mxu0 0
        %401 = vmatpush1.bf16.msra.mxu0 %v391
        %402 = vmatprep.subr.bf16.mxu0 0
        %403 = vmatpush1.bf16.msra.mxu0 %v390
        %404 = vmatprep.subr.bf16.mxu0 0
        %405 = vmatpush1.bf16.msra.mxu0 %v389
        %406 = vmatprep.subr.bf16.mxu0 0
        %407 = vmatpush1.bf16.msra.mxu0 %v388
        %408 = vmatprep.subr.bf16.mxu0 0
        %409 = vmatpush1.bf16.msra.mxu0 %v387
        %410 = vmatprep.subr.bf16.mxu0 0
        %411 = vmatpush1.bf16.msra.mxu0 %v386
        %412 = vmatprep.subr.bf16.mxu0 0
        %413 = vmatpush1.bf16.msra.mxu0 %v385
        %414 = vmatprep.subr.bf16.mxu0 0
        %415 = vmatpush1.bf16.msra.mxu0 %v384
        %416 = vmatprep.subr.bf16.mxu0 0
        %417 = vmatpush2.bf16.msra.mxu0 0
        %418 = vmatprep.subr.bf16.mxu0 0
        %419 = vmatpush2.bf16.msra.mxu0 0
        %420 = vmatprep.subr.bf16.mxu0 0
        %421 = vmatpush2.bf16.msra.mxu0 0
        %422 = vmatprep.subr.bf16.mxu0 0
        %423 = vmatpush2.bf16.msra.mxu0 0
        %424 = vmatprep.subr.bf16.mxu0 0
        %425 = vmatpush2.bf16.msra.mxu0 0
        %426 = vmatprep.subr.bf16.mxu0 0
        %427 = vmatpush2.bf16.msra.mxu0 0
        %428 = vmatprep.subr.bf16.mxu0 0
        %429 = vmatpush2.bf16.msra.mxu0 0
        %430 = vmatprep.subr.bf16.mxu0 0
        %431 = vmatpush2.bf16.msra.mxu0 0
        %432 = vmatprep.mubr.bf16.mxu0 0
        %433 = vmatmul.mubr.bf16.gmra.mxu0 %v335
        %v434 = vpop.f32.mrf.mxu0
        %v435 = vadd.f32 0.0, %v434
        %v436 = vpop.f32.mrf.mxu0
        %v437 = vpop.f32.mrf.mxu0
        %v438 = vpop.f32.mrf.mxu0
        %439 = vdwg.mxu0
        %v440 = vld [vmem:[%s4] sm:$0x1]
        %v442 = vlaneseq
        %v443 = vshrl.u32 %v442, 7
        %v444 = vsub.s32 0, %v443
        %v445 = vrot.slane %v440, %v444
        %v447 = vadd.f32 %v435, %v445
        %vm448 = vcmask 15360
        %449 = vst.msk [vmem:[%s268] sm:$0xff] %vm448, %v447
        %p450 = scmp.lt.s32.totalorder %s20, 1
        %s451 = scalar_select %p450, %s20, 1
        %s452 = smul.addr %s451, 8
        %s453 = scalar_lea.vmem %s5, %s452
        // Predicated region
        $region53: #{tpu_custom_call.1} parent=39 // pred_check
          %p454 = pneg %p148
        $region54: #{tpu_custom_call.1} parent=39 // pred_check_branch
          %456 = sbr.rel (%p454) target = $region56
        $region55: #{tpu_custom_call.1} parent=39 // pred_region
          _
        $region56: #{tpu_custom_call.1} parent=39 // pred_fallthru
          _
      $region40: #{tpu_custom_call.1} parent=5 // pred_fallthru
        _
      %p457 = scmp.le.s32.totalorder 2, %s15
      // Predicated region
      $region57: #{tpu_custom_call.1} parent=5 // pred_check
        %p458 = pneg %p457
      $region58: #{tpu_custom_call.1} parent=5 // pred_check_branch
        %460 = sbr.rel (%p458) target = $region60
      $region59: #{tpu_custom_call.1} parent=5 // pred_region
        %s461 = ssub.s32 %s15, 2
        // Predicated region
        $region61: #{tpu_custom_call.1} parent=59 // pred_check
          %p462 = pneg %p154
        $region62: #{tpu_custom_call.1} parent=59 // pred_check_branch
          %464 = sbr.rel (%p462) target = $region64
        $region63: #{tpu_custom_call.1} parent=59 // pred_region
          %p465 = scmp.lt.s32.totalorder %s21, 1
          %s466 = scalar_select %p465, %s21, 1
          %s467 = smul.addr %s466, 8
          %s468 = scalar_lea.vmem %s5, %s467
        $region64: #{tpu_custom_call.1} parent=59 // pred_fallthru
          _
      $region60: #{tpu_custom_call.1} parent=5 // pred_fallthru
        _
    $region6: #{tpu_custom_call.1} parent=1 // loop_footer
      %s19 = sadd.s32 1, %s15
    $region7: #{tpu_custom_call.1} parent=1 // loop_footer_branch
      %14 = sbr.rel target = $region3
    $region8: #{tpu_custom_call.1} parent=1 // loop_exit
      _
    %469 = vsyncpa [#allocation3], 1
    %s470 = scalar_lea.sflag [#allocation3], 1
    %471 = vsyncpa %s470, 1
    %472 = vsyncpa [#allocation5], 1

</llo_original>
